<compile_context>
chip_gen: v6e
topology: v6e:2x2x1
jax: 0.10.0
libtpu: 0.0.40
codegen_flags: <defaults>
</compile_context>

<pallas_src>
import functools

import jax
import jax.numpy as jnp
from jax.experimental import pallas as pl
from jax.experimental.pallas import tpu as pltpu


def _round_up(a, m):
    return (a + m - 1) // m * m


def _mlp_kernel(x_ref, w_ref, b_ref, o_ref, *, in_dim):
    """Fused 5-layer MLP (relu(fc1..fc4) -> fc5) on one (TB, in_dim) batch tile.

    w_ref: [5, D, D] weight slab (fc1, fc2, fc3, fc4-expert, fc5-expert).
           Padded rows/cols are zero; layer-1 only uses rows [:in_dim].
    b_ref: [5, 1, D] bias slab (f32; padded lanes are zero).
    """
    cdt = w_ref.dtype  # MXU operand dtype (f32 or bf16); accumulate in f32.

    # Layer 1: x is unpadded (TB, in_dim) -> contract over K = in_dim only.
    w1 = w_ref[0][:in_dim, :]
    h = jnp.dot(x_ref[...].astype(cdt), w1,
                preferred_element_type=jnp.float32) + b_ref[0]
    h = jnp.maximum(h, 0.0)

    # Layers 2-4: relu(h @ Wi + bi)
    for i in range(1, 4):
        h = jnp.dot(h.astype(cdt), w_ref[i],
                    preferred_element_type=jnp.float32) + b_ref[i]
        h = jnp.maximum(h, 0.0)

    # Layer 5 (no relu); lane-dense (D >= 128) unmasked store.
    out = jnp.dot(h.astype(cdt), w_ref[4],
                  preferred_element_type=jnp.float32) + b_ref[4]
    o_ref[...] = out.astype(o_ref.dtype)


def _resident_spec(block_shape):
    """Constant-index (VMEM-resident) BlockSpec, single-buffered when supported."""
    idx = lambda i: (0,) * len(block_shape)
    try:
        return pl.BlockSpec(block_shape, idx, pipeline_mode=pl.Buffered(1))
    except TypeError:  # older jax without pipeline_mode: fall back silently
        return pl.BlockSpec(block_shape, idx)


def _choose_tb(batch, sublane):
    """Largest batch tile up to 512 rows; keep grid >= 2 when batch can split
    so dimension_semantics=("parallel",) uses both TensorCores on v7x."""
    tb = min(512, _round_up(batch, sublane))
    if pl.cdiv(batch, tb) < 2 and batch > sublane:
        tb = max(sublane, _round_up(pl.cdiv(batch, 2), sublane))
    return tb


@functools.partial(jax.jit, static_argnames=("out_dim",))
def multi_controller_forward(w_slab, b_slab, x, *, out_dim):
    """Pallas equivalent of MultiControllerNet.forward(expert, x).

    w_slab/b_slab are the packed slabs for ONE expert (trunk + head).  The
    expert lookup happens outside this jitted function, so a single compiled
    kernel serves every expert of the same shape.
    """
    batch, in_dim = x.shape
    D = w_slab.shape[-1]

    sublane = 16 if x.dtype == jnp.bfloat16 else 8   # bf16 packs 2 rows/sublane
    tb = _choose_tb(batch, sublane)
    grid = (pl.cdiv(batch, tb),)                     # ragged last tile OK

    # Advisory cost estimate: actual HBM bytes touched / actual MXU work
    # (layer 1 contracts over K=in_dim, layers 2-5 over the padded D).
    w_bytes = (w_slab.size * w_slab.dtype.itemsize
               + b_slab.size * b_slab.dtype.itemsize)
    io_bytes = (batch * in_dim + batch * D) * x.dtype.itemsize
    cost = pl.CostEstimate(flops=2 * batch * D * (in_dim + 4 * D),
                           transcendentals=0,
                           bytes_accessed=w_bytes + io_bytes)

    # VMEM budget: slabs (x2 in case the single-buffer request is ignored) +
    # double-buffered x/out tiles + slack; capped at 48 MiB so the compiler
    # keeps headroom below v7x's 64 MiB physical VMEM.
    tile_bytes = 2 * tb * (in_dim + D) * x.dtype.itemsize
    need = 2 * w_bytes + 2 * tile_bytes + (8 << 20)
    vmem_limit = int(min(max(need, 16 << 20), 48 << 20))

    out = pl.pallas_call(
        functools.partial(_mlp_kernel, in_dim=in_dim),
        out_shape=jax.ShapeDtypeStruct((batch, D), x.dtype),
        grid=grid,
        in_specs=[
            pl.BlockSpec((tb, in_dim), lambda i: (i, 0)),  # x tile, unpadded features
            _resident_spec((5, D, D)),                     # fused weight slab
            _resident_spec((5, 1, D)),                     # fused bias slab
        ],
        out_specs=pl.BlockSpec((tb, D), lambda i: (i, 0)),  # lane-dense store
        compiler_params=pltpu.CompilerParams(
            dimension_semantics=("parallel",),
            vmem_limit_bytes=vmem_limit),
        cost_estimate=cost,
    )(x, w_slab, b_slab)

    return out[:, :out_dim]


def multi_controller_apply(packed, expert, x):
    """Expert selection outside jit (mirrors getattr(self, 'fc4-{expert}'))."""
    w_slab, b_slab = packed["experts"][expert]
    return multi_controller_forward(w_slab, b_slab, x, out_dim=packed["out_dim"])
    # TODO(synk): for many simultaneous experts, stack heads on a leading grid
    # axis (or batch requests) per call to amortize launch/DMA fixed cost.


# ---------------------------------------------------------------------------
# Parameter construction / packing
# ---------------------------------------------------------------------------

def _init_linear(key, in_dim, out_dim):
    """PyTorch-Linear-style fan-in uniform init; returns (W_T [in,out], b [1,out])."""
    kw, kb = jax.random.split(key)
    bound = 1.0 / jnp.sqrt(jnp.float32(in_dim))
    w_t = jax.random.uniform(kw, (in_dim, out_dim), jnp.float32, -bound, bound)
    b = jax.random.uniform(kb, (1, out_dim), jnp.float32, -bound, bound)
    return w_t, b


def init_params(key, input_dim, h1, h2, h3, h4, output_dim, expert_policies):
    keys = jax.random.split(key, 3 + 2 * len(expert_policies))
    w1, b1 = _init_linear(keys[0], input_dim, h1)
    w2, b2 = _init_linear(keys[1], h1, h2)
    w3, b3 = _init_linear(keys[2], h2, h3)
    params = {"w1": w1, "b1": b1, "w2": w2, "b2": b2, "w3": w3, "b3": b3,
              "experts": {}}
    for i, identity in enumerate(expert_policies):
        w4, b4 = _init_linear(keys[3 + 2 * i], h3, h4)
        w5, b5 = _init_linear(keys[4 + 2 * i], h4, output_dim)
        params["experts"][identity] = {"w4": w4, "b4": b4, "w5": w5, "b5": b5}
    return params


def pack_params(params, expert_policies, weight_dtype=jnp.bfloat16):
    """Zero-pad every layer to a common lane-dense width D (multiple of 128)
    and pack, per expert, one [5,D,D] weight slab and one [5,1,D] bias slab
    (trunk fc1-3 + that expert's fc4/fc5).  Padding is exact: padded weight
    rows/cols and bias lanes are zero, so padded activation lanes stay zero
    through every relu and fc5; the final [:, :out_dim] slice removes them.

    weight_dtype defaults to bfloat16 (MXU-native on v6e/v7x, half the weight
    DMA/VMEM); biases stay f32 and the kernel accumulates in f32.
    """
    e0 = params["experts"][expert_policies[0]]
    dims = [params["w1"].shape[0], params["w1"].shape[1],
            params["w2"].shape[1], params["w3"].shape[1],
            e0["w4"].shape[1], e0["w5"].shape[1]]
    D = _round_up(max(dims), 128)
    # TODO(synk): if real hidden dims grow past ~1k, switch to per-layer padded
    # shapes / a K-N tiling grid axis instead of keeping all 5 DxD layers
    # resident (the pad-to-max-D scheme scales quadratically and hits v7x's
    # 64 MiB VMEM first); round D to 256 on v6e/v7x when dims exceed 128.

    def padw(w):
        return jnp.pad(w, ((0, D - w.shape[0]),
                           (0, D - w.shape[1]))).astype(weight_dtype)

    def padb(b):
        b = b.reshape(1, -1)
        return jnp.pad(b, ((0, 0), (0, D - b.shape[-1]))).astype(jnp.float32)

    trunk_w = [padw(params["w1"]), padw(params["w2"]), padw(params["w3"])]
    trunk_b = [padb(params["b1"]), padb(params["b2"]), padb(params["b3"])]

    packed = {"experts": {}, "in_dim": dims[0], "out_dim": dims[-1], "D": D}
    for name in expert_policies:
        e = params["experts"][name]
        packed["experts"][name] = (
            jnp.stack(trunk_w + [padw(e["w4"]), padw(e["w5"])]),
            jnp.stack(trunk_b + [padb(e["b4"]), padb(e["b5"])]),
        )
    return packed


def _reference_forward(params, expert, x):
    """Plain-JAX reference (mirrors the PyTorch forward exactly)."""
    head = params["experts"][expert]
    h = jax.nn.relu(x @ params["w1"] + params["b1"])
    h = jax.nn.relu(h @ params["w2"] + params["b2"])
    h = jax.nn.relu(h @ params["w3"] + params["b3"])
    h = jax.nn.relu(h @ head["w4"] + head["b4"])
    return h @ head["w5"] + head["b5"]


if __name__ == "__main__":
    input_dim, h1, h2, h3, h4, output_dim = 32, 32, 32, 32, 32, 16
    expert_policies = ["alpha", "beta", "gamma"]

    key = jax.random.PRNGKey(0)
    pkey, xkey, xkey2 = jax.random.split(key, 3)
    params = init_params(pkey, input_dim, h1, h2, h3, h4, output_dim,
                         expert_policies)

    # Small latency-regime batch, as the module is typically used.
    x = jax.random.normal(xkey, (8, input_dim), jnp.float32)

    # bf16 weights (default): one compiled kernel serves every expert, since
    # the expert lookup happens outside jit and all heads share shapes.
    packed = pack_params(params, expert_policies)
    for expert in expert_policies:
        ref = _reference_forward(params, expert, x)
        out = jax.block_until_ready(multi_controller_apply(packed, expert, x))
        assert out.shape == (8, output_dim), out.shape
        assert jnp.allclose(out, ref, atol=5e-2, rtol=5e-2), f"bf16 mismatch ({expert})"

    # f32 weights: tight match vs reference.
    packed_f32 = pack_params(params, expert_policies, weight_dtype=jnp.float32)
    out = jax.block_until_ready(multi_controller_apply(packed_f32, "beta", x))
    assert jnp.allclose(out, _reference_forward(params, "beta", x),
                        atol=1e-5, rtol=1e-5), "f32 mismatch vs reference"

    # Larger, ragged batch: exercises the multi-tile grid (>=2 tiles so both
    # v7x TensorCores get work) and the dropped-out-of-range-rows tail.
    xb = jax.random.normal(xkey2, (200, input_dim), jnp.float32)
    refb = _reference_forward(params, "gamma", xb)
    outb = jax.block_until_ready(multi_controller_apply(packed_f32, "gamma", xb))
    assert outb.shape == (200, output_dim), outb.shape
    assert jnp.allclose(outb, refb, atol=1e-5, rtol=1e-5), "ragged-batch mismatch"

    print("KERNEL_OK")
</pallas_src>

<mosaic_0001>
module attributes {stable_mosaic.version = 11 : i64} {
  func.func @_mlp_kernel(%arg0: i32, %arg1: memref<8x32xf32, #tpu.memory_space<vmem>>, %arg2: memref<5x128x128xbf16, #tpu.memory_space<vmem>>, %arg3: memref<5x1x128xf32, #tpu.memory_space<vmem>>, %arg4: memref<8x128xf32, #tpu.memory_space<vmem>>) attributes {dimension_semantics = [#tpu.dimension_semantics<parallel>], iteration_bounds = array<i64: 1>, scalar_prefetch = 0 : i64, scratch_operands = 0 : i64, tpu.core_type = #tpu.core_type<tc>, window_params = [{transform_indices = @transform_0, window_bounds = array<i64: 8, 32>}, {pipeline_mode = #tpu.pipeline_mode<synchronous>, transform_indices = @transform_1, window_bounds = array<i64: 5, 128, 128>}, {pipeline_mode = #tpu.pipeline_mode<synchronous>, transform_indices = @transform_2, window_bounds = array<i64: 5, 1, 128>}, {transform_indices = @transform_3, window_bounds = array<i64: 8, 128>}]} {
    %c0 = arith.constant 0 : index
    %c0_0 = arith.constant 0 : index
    %c0_1 = arith.constant 0 : index
    %0 = vector.load %arg2[%c0, %c0_0, %c0_1] : memref<5x128x128xbf16, #tpu.memory_space<vmem>>, vector<1x128x128xbf16>
    %1 = vector.shape_cast %0 : vector<1x128x128xbf16> to vector<128x128xbf16>
    %2 = vector.extract_strided_slice %1 {offsets = [0, 0], sizes = [32, 128], strides = [1, 1]} : vector<128x128xbf16> to vector<32x128xbf16>
    %c0_2 = arith.constant 0 : index
    %c0_3 = arith.constant 0 : index
    %3 = vector.load %arg1[%c0_2, %c0_3] : memref<8x32xf32, #tpu.memory_space<vmem>>, vector<8x32xf32>
    %4 = arith.truncf %3 : vector<8x32xf32> to vector<8x32xbf16>
    %cst = arith.constant dense<0.000000e+00> : vector<8x128xf32>
    %5 = tpu.matmul %4, %2, %cst {dimension_numbers = #tpu.dot_dimension_numbers<[1], [0], [0], [1], [0, 0, 1, 1], [], []>} : vector<8x32xbf16>, vector<32x128xbf16>, vector<8x128xf32> -> vector<8x128xf32>
    %c0_4 = arith.constant 0 : index
    %c0_5 = arith.constant 0 : index
    %c0_6 = arith.constant 0 : index
    %6 = vector.load %arg3[%c0_4, %c0_5, %c0_6] : memref<5x1x128xf32, #tpu.memory_space<vmem>>, vector<1x1x128xf32>
    %7 = vector.shape_cast %6 : vector<1x1x128xf32> to vector<1x128xf32>
    %8 = vector.broadcast %7 : vector<1x128xf32> to vector<8x128xf32>
    %9 = arith.addf %5, %8 : vector<8x128xf32>
    %cst_7 = arith.constant 0.000000e+00 : f32
    %10 = vector.broadcast %cst_7 : f32 to vector<8x128xf32>
    %11 = arith.maximumf %9, %10 : vector<8x128xf32>
    %12 = arith.truncf %11 : vector<8x128xf32> to vector<8x128xbf16>
    %c1 = arith.constant 1 : index
    %c0_8 = arith.constant 0 : index
    %c0_9 = arith.constant 0 : index
    %13 = vector.load %arg2[%c1, %c0_8, %c0_9] : memref<5x128x128xbf16, #tpu.memory_space<vmem>>, vector<1x128x128xbf16>
    %14 = vector.shape_cast %13 : vector<1x128x128xbf16> to vector<128x128xbf16>
    %cst_10 = arith.constant dense<0.000000e+00> : vector<8x128xf32>
    %15 = tpu.matmul %12, %14, %cst_10 {dimension_numbers = #tpu.dot_dimension_numbers<[1], [0], [0], [1], [0, 0, 1, 1], [], []>} : vector<8x128xbf16>, vector<128x128xbf16>, vector<8x128xf32> -> vector<8x128xf32>
    %c1_11 = arith.constant 1 : index
    %c0_12 = arith.constant 0 : index
    %c0_13 = arith.constant 0 : index
    %16 = vector.load %arg3[%c1_11, %c0_12, %c0_13] : memref<5x1x128xf32, #tpu.memory_space<vmem>>, vector<1x1x128xf32>
    %17 = vector.shape_cast %16 : vector<1x1x128xf32> to vector<1x128xf32>
    %18 = vector.broadcast %17 : vector<1x128xf32> to vector<8x128xf32>
    %19 = arith.addf %15, %18 : vector<8x128xf32>
    %cst_14 = arith.constant 0.000000e+00 : f32
    %20 = vector.broadcast %cst_14 : f32 to vector<8x128xf32>
    %21 = arith.maximumf %19, %20 : vector<8x128xf32>
    %22 = arith.truncf %21 : vector<8x128xf32> to vector<8x128xbf16>
    %c2 = arith.constant 2 : index
    %c0_15 = arith.constant 0 : index
    %c0_16 = arith.constant 0 : index
    %23 = vector.load %arg2[%c2, %c0_15, %c0_16] : memref<5x128x128xbf16, #tpu.memory_space<vmem>>, vector<1x128x128xbf16>
    %24 = vector.shape_cast %23 : vector<1x128x128xbf16> to vector<128x128xbf16>
    %cst_17 = arith.constant dense<0.000000e+00> : vector<8x128xf32>
    %25 = tpu.matmul %22, %24, %cst_17 {dimension_numbers = #tpu.dot_dimension_numbers<[1], [0], [0], [1], [0, 0, 1, 1], [], []>} : vector<8x128xbf16>, vector<128x128xbf16>, vector<8x128xf32> -> vector<8x128xf32>
    %c2_18 = arith.constant 2 : index
    %c0_19 = arith.constant 0 : index
    %c0_20 = arith.constant 0 : index
    %26 = vector.load %arg3[%c2_18, %c0_19, %c0_20] : memref<5x1x128xf32, #tpu.memory_space<vmem>>, vector<1x1x128xf32>
    %27 = vector.shape_cast %26 : vector<1x1x128xf32> to vector<1x128xf32>
    %28 = vector.broadcast %27 : vector<1x128xf32> to vector<8x128xf32>
    %29 = arith.addf %25, %28 : vector<8x128xf32>
    %cst_21 = arith.constant 0.000000e+00 : f32
    %30 = vector.broadcast %cst_21 : f32 to vector<8x128xf32>
    %31 = arith.maximumf %29, %30 : vector<8x128xf32>
    %32 = arith.truncf %31 : vector<8x128xf32> to vector<8x128xbf16>
    %c3 = arith.constant 3 : index
    %c0_22 = arith.constant 0 : index
    %c0_23 = arith.constant 0 : index
    %33 = vector.load %arg2[%c3, %c0_22, %c0_23] : memref<5x128x128xbf16, #tpu.memory_space<vmem>>, vector<1x128x128xbf16>
    %34 = vector.shape_cast %33 : vector<1x128x128xbf16> to vector<128x128xbf16>
    %cst_24 = arith.constant dense<0.000000e+00> : vector<8x128xf32>
    %35 = tpu.matmul %32, %34, %cst_24 {dimension_numbers = #tpu.dot_dimension_numbers<[1], [0], [0], [1], [0, 0, 1, 1], [], []>} : vector<8x128xbf16>, vector<128x128xbf16>, vector<8x128xf32> -> vector<8x128xf32>
    %c3_25 = arith.constant 3 : index
    %c0_26 = arith.constant 0 : index
    %c0_27 = arith.constant 0 : index
    %36 = vector.load %arg3[%c3_25, %c0_26, %c0_27] : memref<5x1x128xf32, #tpu.memory_space<vmem>>, vector<1x1x128xf32>
    %37 = vector.shape_cast %36 : vector<1x1x128xf32> to vector<1x128xf32>
    %38 = vector.broadcast %37 : vector<1x128xf32> to vector<8x128xf32>
    %39 = arith.addf %35, %38 : vector<8x128xf32>
    %cst_28 = arith.constant 0.000000e+00 : f32
    %40 = vector.broadcast %cst_28 : f32 to vector<8x128xf32>
    %41 = arith.maximumf %39, %40 : vector<8x128xf32>
    %42 = arith.truncf %41 : vector<8x128xf32> to vector<8x128xbf16>
    %c4 = arith.constant 4 : index
    %c0_29 = arith.constant 0 : index
    %c0_30 = arith.constant 0 : index
    %43 = vector.load %arg2[%c4, %c0_29, %c0_30] : memref<5x128x128xbf16, #tpu.memory_space<vmem>>, vector<1x128x128xbf16>
    %44 = vector.shape_cast %43 : vector<1x128x128xbf16> to vector<128x128xbf16>
    %cst_31 = arith.constant dense<0.000000e+00> : vector<8x128xf32>
    %45 = tpu.matmul %42, %44, %cst_31 {dimension_numbers = #tpu.dot_dimension_numbers<[1], [0], [0], [1], [0, 0, 1, 1], [], []>} : vector<8x128xbf16>, vector<128x128xbf16>, vector<8x128xf32> -> vector<8x128xf32>
    %c4_32 = arith.constant 4 : index
    %c0_33 = arith.constant 0 : index
    %c0_34 = arith.constant 0 : index
    %46 = vector.load %arg3[%c4_32, %c0_33, %c0_34] : memref<5x1x128xf32, #tpu.memory_space<vmem>>, vector<1x1x128xf32>
    %47 = vector.shape_cast %46 : vector<1x1x128xf32> to vector<1x128xf32>
    %48 = vector.broadcast %47 : vector<1x128xf32> to vector<8x128xf32>
    %49 = arith.addf %45, %48 : vector<8x128xf32>
    %c0_35 = arith.constant 0 : index
    %c0_36 = arith.constant 0 : index
    %50 = vector.load %arg4[%c0_35, %c0_36] : memref<8x128xf32, #tpu.memory_space<vmem>>, vector<8x128xf32>
    tpu.vector_store %arg4[%c0_35, %c0_36], %49 {strides = array<i32>} : memref<8x128xf32, #tpu.memory_space<vmem>>, vector<8x128xf32>,
    return
  }
  func.func @transform_0(%arg0: i32) -> (i32, i32) {
    %c0_i32 = arith.constant 0 : i32
    %c0_i32_0 = arith.constant 0 : i32
    return %arg0, %c0_i32 : i32, i32
  }
  func.func @transform_1(%arg0: i32) -> (i32, i32, i32) {
    %c0_i32 = arith.constant 0 : i32
    %c0_i32_0 = arith.constant 0 : i32
    %c0_i32_1 = arith.constant 0 : i32
    %c0_i32_2 = arith.constant 0 : i32
    return %c0_i32, %c0_i32_0, %c0_i32_1 : i32, i32, i32
  }
  func.func @transform_2(%arg0: i32) -> (i32, i32, i32) {
    %c0_i32 = arith.constant 0 : i32
    %c0_i32_0 = arith.constant 0 : i32
    %c0_i32_1 = arith.constant 0 : i32
    %c0_i32_2 = arith.constant 0 : i32
    return %c0_i32, %c0_i32_0, %c0_i32_1 : i32, i32, i32
  }
  func.func @transform_3(%arg0: i32) -> (i32, i32) {
    %c0_i32 = arith.constant 0 : i32
    %c0_i32_0 = arith.constant 0 : i32
    return %arg0, %c0_i32 : i32, i32
  }
}

</mosaic_0001>

<llo_original>
// kernel: multi_controller_forward.1
$region0: #{multi_controller_forward.1}
  #allocation0 [shape = 'u32[]', space=smem, size = 0x4, offset = 0x4, fixed_abs, tag = 'smem constant byte address 0x4 - core index']
  #allocation1 [shape = 'u32[144,128]{1,0:T(1,128)}', space=vmem, size = 0x12000, scoped, tag = 'internal scratch']
  %s0 = inlined_call_operand.hbm [shape: f32[8,32], index: 0, kind: input, shape index: {}]
  %s1 = inlined_call_operand.hbm [shape: bf16[5,128,128], index: 1, kind: input, shape index: {}]
  %s2 = inlined_call_operand.hbm [shape: f32[5,1,128], index: 2, kind: input, shape index: {}]
  %s3 = inlined_call_operand.hbm [shape: f32[8,128], index: 3, kind: output, shape index: {}]
  %s4 = sld [smem:[#allocation0]]
  $region34: #{multi_controller_forward.1} parent=0
    _
  %s6 = ssub.s32 1, %s4
  %s7 = scalar_select 0, %s6, %s4
  $region1: #{multi_controller_forward.1} parent=0
    #allocation2 [shape = 'u8[4096]{0}', space=vmem, size = 0x1000, scoped, tag = 'input window, operand 0, single buffered']
    #allocation3 [shape = 's32[1]{0}', space=sflag, size = 0x4, scoped, tag = 'scoped memory for multi_controller_forward.1']
    #allocation4 [shape = 's32[1]{0}', space=sflag, size = 0x4, scoped, tag = 'scoped memory for multi_controller_forward.1']
    #allocation5 [shape = 'u8[163840]{0}', space=vmem, size = 0x28000, scoped, tag = 'input window, operand 1, single buffered']
    #allocation6 [shape = 's32[1]{0}', space=sflag, size = 0x4, scoped, tag = 'scoped memory for multi_controller_forward.1']
    #allocation7 [shape = 'u8[2560]{0}', space=vmem, size = 0xc00, scoped, tag = 'input window, operand 2, single buffered']
    #allocation8 [shape = 'u8[4096]{0}', space=vmem, size = 0x1000, scoped, tag = 'output window, operand 0, single buffered']
    %8 = vsyncpa [#allocation3], 0
    %9 = vsyncpa [#allocation6], 0
    %10 = vsyncpa [#allocation4], 0
    // Predicated region
    $region2: #{multi_controller_forward.1} parent=1 // pred_check
      _
    $region3: #{multi_controller_forward.1} parent=1 // pred_check_branch
      %12 = sbr.rel (0) target = $region5
    $region4: #{multi_controller_forward.1} parent=1 // pred_region
      %s14 = ssub.s32 128, 128
      %15 = vsyncadd [#allocation3], %s14
      %s17 = sshll.u32 [#allocation2], 4
      %s18 = int_to_ptr.vmem [resolvable:$true] %s17
      %20 = dma.hbm_to_vmem [thread:$0]  %s0, 128, %s18, [#allocation3]
    $region5: #{multi_controller_forward.1} parent=1 // pred_fallthru
      _
    // Predicated region
    $region6: #{multi_controller_forward.1} parent=1 // pred_check
      _
    $region7: #{multi_controller_forward.1} parent=1 // pred_check_branch
      %22 = sbr.rel (0) target = $region9
    $region8: #{multi_controller_forward.1} parent=1 // pred_region
      %s24 = ssub.s32 5120, 5120
      %25 = vsyncadd [#allocation6], %s24
      %s26 = sshll.u32 [#allocation5], 4
      %s27 = int_to_ptr.vmem [resolvable:$true] %s26
      %32 = dma.hbm_to_vmem [thread:$0]  %s1, 5120, %s27, [#allocation6], 64, 64, 4
    $region9: #{multi_controller_forward.1} parent=1 // pred_fallthru
      _
    // Predicated region
    $region10: #{multi_controller_forward.1} parent=1 // pred_check
      _
    $region11: #{multi_controller_forward.1} parent=1 // pred_check_branch
      %34 = sbr.rel (0) target = $region13
    $region12: #{multi_controller_forward.1} parent=1 // pred_region
      %s36 = ssub.s32 80, 80
      %37 = vsyncadd [#allocation6], %s36
      %s38 = sshll.u32 [#allocation7], 4
      %s39 = int_to_ptr.vmem [resolvable:$true] %s38
      %44 = dma.hbm_to_vmem [thread:$0]  %s2, 80, %s39, [#allocation6], 16, 16, 1
    $region13: #{multi_controller_forward.1} parent=1 // pred_fallthru
      _
    // Predicated region
    $region14: #{multi_controller_forward.1} parent=1 // pred_check
      _
    $region15: #{multi_controller_forward.1} parent=1 // pred_check_branch
      %46 = sbr.rel (0) target = $region17
    $region16: #{multi_controller_forward.1} parent=1 // pred_region
      %47 = dma.done [#allocation3], 128
    $region17: #{multi_controller_forward.1} parent=1 // pred_fallthru
      _
    // Predicated region
    $region18: #{multi_controller_forward.1} parent=1 // pred_check
      _
    $region19: #{multi_controller_forward.1} parent=1 // pred_check_branch
      %49 = sbr.rel (0) target = $region21
    $region20: #{multi_controller_forward.1} parent=1 // pred_region
      %50 = dma.done [#allocation6], 5120
    $region21: #{multi_controller_forward.1} parent=1 // pred_fallthru
      _
    // Predicated region
    $region22: #{multi_controller_forward.1} parent=1 // pred_check
      _
    $region23: #{multi_controller_forward.1} parent=1 // pred_check_branch
      %52 = sbr.rel (0) target = $region25
    $region24: #{multi_controller_forward.1} parent=1 // pred_region
      %53 = dma.done [#allocation6], 80
    $region25: #{multi_controller_forward.1} parent=1 // pred_fallthru
      _
    %v55 = vld [vmem:[#allocation5] sm:$0xf]
    %v56 = vld [vmem:[#allocation5 + $0x4] sm:$0xf]
    %v57 = vld [vmem:[#allocation5 + $0x8] sm:$0xf]
    %v58 = vld [vmem:[#allocation5 + $0xc] sm:$0xf]
    %v59 = vld [vmem:[#allocation2] sm:$0xff]
    %v60 = vpack.c.bf16 %v59, %v59
    %v61 = vld [vmem:[#allocation7] sm:$0x1]
    %v63 = vlaneseq
    %v64 = vshrl.u32 %v63, 7
    %v65 = vsub.s32 0, %v64
    %v66 = vrot.slane %v61, %v65
    %v72 = vunpack.c.l.b16 %v55
    %v73 = vunpack.c.l.b16 %v56
    %v74 = vunpack.c.l.b16 %v57
    %v75 = vunpack.c.l.b16 %v58
    %v76 = vpack.c.b16 %v73, %v72
    %v77 = vpack.c.b16 %v75, %v74
    %vm80 = vcmask 261120
    %v82 = vsel %vm80, %v60, 0
    %84 = vmatprep.subr.bf16.mxu0 0
    %85 = vmatpush1.bf16.msra.mxu0 0
    %86 = vmatprep.subr.bf16.mxu0 0
    %87 = vmatpush1.bf16.msra.mxu0 0
    %88 = vmatprep.subr.bf16.mxu0 0
    %89 = vmatpush1.bf16.msra.mxu0 0
    %90 = vmatprep.subr.bf16.mxu0 0
    %91 = vmatpush1.bf16.msra.mxu0 0
    %92 = vmatprep.subr.bf16.mxu0 0
    %93 = vmatpush1.bf16.msra.mxu0 0
    %94 = vmatprep.subr.bf16.mxu0 0
    %95 = vmatpush1.bf16.msra.mxu0 0
    %96 = vmatprep.subr.bf16.mxu0 0
    %97 = vmatpush1.bf16.msra.mxu0 %v77
    %98 = vmatprep.subr.bf16.mxu0 0
    %99 = vmatpush1.bf16.msra.mxu0 %v76
    %100 = vmatprep.subr.bf16.mxu0 0
    %101 = vmatpush2.bf16.msra.mxu0 0
    %102 = vmatprep.subr.bf16.mxu0 0
    %103 = vmatpush2.bf16.msra.mxu0 0
    %104 = vmatprep.subr.bf16.mxu0 0
    %105 = vmatpush2.bf16.msra.mxu0 0
    %106 = vmatprep.subr.bf16.mxu0 0
    %107 = vmatpush2.bf16.msra.mxu0 0
    %108 = vmatprep.subr.bf16.mxu0 0
    %109 = vmatpush2.bf16.msra.mxu0 0
    %110 = vmatprep.subr.bf16.mxu0 0
    %111 = vmatpush2.bf16.msra.mxu0 0
    %112 = vmatprep.subr.bf16.mxu0 0
    %113 = vmatpush2.bf16.msra.mxu0 0
    %114 = vmatprep.subr.bf16.mxu0 0
    %115 = vmatpush2.bf16.msra.mxu0 0
    %116 = vmatprep.mubr.bf16.mxu0 0
    %117 = vmatmul.mubr.bf16.gmra.mxu0 %v82
    %v118 = vpop.f32.mrf.mxu0
    %v119 = vadd.f32 %v66, %v118
    %v120 = vpop.f32.mrf.mxu0
    %v121 = vpop.f32.mrf.mxu0
    %v122 = vpop.f32.mrf.mxu0
    %123 = vdwg.mxu0
    %v124 = vmax.f32 %v119, 0.0
    %v125 = vpack.c.bf16 %v124, %v124
    %s126 = scalar_lea.vmem [#allocation5], 64
    %v127 = vld [vmem:[%s126] sm:$0xf]
    %v128 = vld [vmem:[%s126 + $0x4] sm:$0xf]
    %v129 = vld [vmem:[%s126 + $0x8] sm:$0xf]
    %v130 = vld [vmem:[%s126 + $0xc] sm:$0xf]
    %v131 = vld [vmem:[%s126 + $0x10] sm:$0xf]
    %v132 = vld [vmem:[%s126 + $0x14] sm:$0xf]
    %v133 = vld [vmem:[%s126 + $0x18] sm:$0xf]
    %v134 = vld [vmem:[%s126 + $0x1c] sm:$0xf]
    %v135 = vld [vmem:[%s126 + $0x20] sm:$0xf]
    %v136 = vld [vmem:[%s126 + $0x24] sm:$0xf]
    %v137 = vld [vmem:[%s126 + $0x28] sm:$0xf]
    %v138 = vld [vmem:[%s126 + $0x2c] sm:$0xf]
    %v139 = vld [vmem:[%s126 + $0x30] sm:$0xf]
    %v140 = vld [vmem:[%s126 + $0x34] sm:$0xf]
    %v141 = vld [vmem:[%s126 + $0x38] sm:$0xf]
    %v142 = vld [vmem:[%s126 + $0x3c] sm:$0xf]
    %s143 = scalar_lea.vmem [#allocation7], 1
    %v144 = vld [vmem:[%s143] sm:$0x1]
    %v146 = vlaneseq
    %v147 = vshrl.u32 %v146, 7
    %v148 = vsub.s32 0, %v147
    %v149 = vrot.slane %v144, %v148
    %v167 = vunpack.c.l.b16 %v127
    %v168 = vunpack.c.l.b16 %v128
    %v169 = vunpack.c.l.b16 %v129
    %v170 = vunpack.c.l.b16 %v130
    %v171 = vunpack.c.l.b16 %v131
    %v172 = vunpack.c.l.b16 %v132
    %v173 = vunpack.c.l.b16 %v133
    %v174 = vunpack.c.l.b16 %v134
    %v175 = vunpack.c.l.b16 %v135
    %v176 = vunpack.c.l.b16 %v136
    %v177 = vunpack.c.l.b16 %v137
    %v178 = vunpack.c.l.b16 %v138
    %v179 = vunpack.c.l.b16 %v139
    %v180 = vunpack.c.l.b16 %v140
    %v181 = vunpack.c.l.b16 %v141
    %v182 = vunpack.c.l.b16 %v142
    %v183 = vpack.c.b16 %v168, %v167
    %v184 = vpack.c.b16 %v170, %v169
    %v185 = vpack.c.b16 %v172, %v171
    %v186 = vpack.c.b16 %v174, %v173
    %v187 = vpack.c.b16 %v176, %v175
    %v188 = vpack.c.b16 %v178, %v177
    %v189 = vpack.c.b16 %v180, %v179
    %v190 = vpack.c.b16 %v182, %v181
    %199 = vmatprep.subr.bf16.mxu0 0
    %200 = vmatpush1.bf16.msra.mxu0 %v190
    %201 = vmatprep.subr.bf16.mxu0 0
    %202 = vmatpush1.bf16.msra.mxu0 %v189
    %203 = vmatprep.subr.bf16.mxu0 0
    %204 = vmatpush1.bf16.msra.mxu0 %v188
    %205 = vmatprep.subr.bf16.mxu0 0
    %206 = vmatpush1.bf16.msra.mxu0 %v187
    %207 = vmatprep.subr.bf16.mxu0 0
    %208 = vmatpush1.bf16.msra.mxu0 %v186
    %209 = vmatprep.subr.bf16.mxu0 0
    %210 = vmatpush1.bf16.msra.mxu0 %v185
    %211 = vmatprep.subr.bf16.mxu0 0
    %212 = vmatpush1.bf16.msra.mxu0 %v184
    %213 = vmatprep.subr.bf16.mxu0 0
    %214 = vmatpush1.bf16.msra.mxu0 %v183
    %215 = vmatprep.subr.bf16.mxu0 0
    %216 = vmatpush2.bf16.msra.mxu0 0
    %217 = vmatprep.subr.bf16.mxu0 0
    %218 = vmatpush2.bf16.msra.mxu0 0
    %219 = vmatprep.subr.bf16.mxu0 0
    %220 = vmatpush2.bf16.msra.mxu0 0
    %221 = vmatprep.subr.bf16.mxu0 0
    %222 = vmatpush2.bf16.msra.mxu0 0
    %223 = vmatprep.subr.bf16.mxu0 0
    %224 = vmatpush2.bf16.msra.mxu0 0
    %225 = vmatprep.subr.bf16.mxu0 0
    %226 = vmatpush2.bf16.msra.mxu0 0
    %227 = vmatprep.subr.bf16.mxu0 0
    %228 = vmatpush2.bf16.msra.mxu0 0
    %229 = vmatprep.subr.bf16.mxu0 0
    %230 = vmatpush2.bf16.msra.mxu0 0
    %231 = vmatprep.mubr.bf16.mxu0 0
    %232 = vmatmul.mubr.bf16.gmra.mxu0 %v125
    %v233 = vpop.f32.mrf.mxu0
    %v234 = vadd.f32 %v149, %v233
    %v235 = vpop.f32.mrf.mxu0
    %v236 = vpop.f32.mrf.mxu0
    %v237 = vpop.f32.mrf.mxu0
    %238 = vdwg.mxu0
    %v239 = vmax.f32 %v234, 0.0
    %v240 = vpack.c.bf16 %v239, %v239
    %s241 = scalar_lea.vmem [#allocation5], 128
    %v242 = vld [vmem:[%s241] sm:$0xf]
    %v243 = vld [vmem:[%s241 + $0x4] sm:$0xf]
    %v244 = vld [vmem:[%s241 + $0x8] sm:$0xf]
    %v245 = vld [vmem:[%s241 + $0xc] sm:$0xf]
    %v246 = vld [vmem:[%s241 + $0x10] sm:$0xf]
    %v247 = vld [vmem:[%s241 + $0x14] sm:$0xf]
    %v248 = vld [vmem:[%s241 + $0x18] sm:$0xf]
    %v249 = vld [vmem:[%s241 + $0x1c] sm:$0xf]
    %v250 = vld [vmem:[%s241 + $0x20] sm:$0xf]
    %v251 = vld [vmem:[%s241 + $0x24] sm:$0xf]
    %v252 = vld [vmem:[%s241 + $0x28] sm:$0xf]
    %v253 = vld [vmem:[%s241 + $0x2c] sm:$0xf]
    %v254 = vld [vmem:[%s241 + $0x30] sm:$0xf]
    %v255 = vld [vmem:[%s241 + $0x34] sm:$0xf]
    %v256 = vld [vmem:[%s241 + $0x38] sm:$0xf]
    %v257 = vld [vmem:[%s241 + $0x3c] sm:$0xf]
    %s258 = scalar_lea.vmem [#allocation7], 2
    %v259 = vld [vmem:[%s258] sm:$0x1]
    %v261 = vlaneseq
    %v262 = vshrl.u32 %v261, 7
    %v263 = vsub.s32 0, %v262
    %v264 = vrot.slane %v259, %v263
    %v282 = vunpack.c.l.b16 %v242
    %v283 = vunpack.c.l.b16 %v243
    %v284 = vunpack.c.l.b16 %v244
    %v285 = vunpack.c.l.b16 %v245
    %v286 = vunpack.c.l.b16 %v246
    %v287 = vunpack.c.l.b16 %v247
    %v288 = vunpack.c.l.b16 %v248
    %v289 = vunpack.c.l.b16 %v249
    %v290 = vunpack.c.l.b16 %v250
    %v291 = vunpack.c.l.b16 %v251
    %v292 = vunpack.c.l.b16 %v252
    %v293 = vunpack.c.l.b16 %v253
    %v294 = vunpack.c.l.b16 %v254
    %v295 = vunpack.c.l.b16 %v255
    %v296 = vunpack.c.l.b16 %v256
    %v297 = vunpack.c.l.b16 %v257
    %v298 = vpack.c.b16 %v283, %v282
    %v299 = vpack.c.b16 %v285, %v284
    %v300 = vpack.c.b16 %v287, %v286
    %v301 = vpack.c.b16 %v289, %v288
    %v302 = vpack.c.b16 %v291, %v290
    %v303 = vpack.c.b16 %v293, %v292
    %v304 = vpack.c.b16 %v295, %v294
    %v305 = vpack.c.b16 %v297, %v296
    %314 = vmatprep.subr.bf16.mxu0 0
    %315 = vmatpush1.bf16.msra.mxu0 %v305
    %316 = vmatprep.subr.bf16.mxu0 0
    %317 = vmatpush1.bf16.msra.mxu0 %v304
    %318 = vmatprep.subr.bf16.mxu0 0
    %319 = vmatpush1.bf16.msra.mxu0 %v303
    %320 = vmatprep.subr.bf16.mxu0 0
    %321 = vmatpush1.bf16.msra.mxu0 %v302
    %322 = vmatprep.subr.bf16.mxu0 0
    %323 = vmatpush1.bf16.msra.mxu0 %v301
    %324 = vmatprep.subr.bf16.mxu0 0
    %325 = vmatpush1.bf16.msra.mxu0 %v300
    %326 = vmatprep.subr.bf16.mxu0 0
    %327 = vmatpush1.bf16.msra.mxu0 %v299
    %328 = vmatprep.subr.bf16.mxu0 0
    %329 = vmatpush1.bf16.msra.mxu0 %v298
    %330 = vmatprep.subr.bf16.mxu0 0
    %331 = vmatpush2.bf16.msra.mxu0 0
    %332 = vmatprep.subr.bf16.mxu0 0
    %333 = vmatpush2.bf16.msra.mxu0 0
    %334 = vmatprep.subr.bf16.mxu0 0
    %335 = vmatpush2.bf16.msra.mxu0 0
    %336 = vmatprep.subr.bf16.mxu0 0
    %337 = vmatpush2.bf16.msra.mxu0 0
    %338 = vmatprep.subr.bf16.mxu0 0
    %339 = vmatpush2.bf16.msra.mxu0 0
    %340 = vmatprep.subr.bf16.mxu0 0
    %341 = vmatpush2.bf16.msra.mxu0 0
    %342 = vmatprep.subr.bf16.mxu0 0
    %343 = vmatpush2.bf16.msra.mxu0 0
    %344 = vmatprep.subr.bf16.mxu0 0
    %345 = vmatpush2.bf16.msra.mxu0 0
    %346 = vmatprep.mubr.bf16.mxu0 0
    %347 = vmatmul.mubr.bf16.gmra.mxu0 %v240
    %v348 = vpop.f32.mrf.mxu0
    %v349 = vadd.f32 %v264, %v348
    %v350 = vpop.f32.mrf.mxu0
    %v351 = vpop.f32.mrf.mxu0
    %v352 = vpop.f32.mrf.mxu0
    %353 = vdwg.mxu0
    %v354 = vmax.f32 %v349, 0.0
    %v355 = vpack.c.bf16 %v354, %v354
    %s356 = scalar_lea.vmem [#allocation5], 192
    %v357 = vld [vmem:[%s356] sm:$0xf]
    %v358 = vld [vmem:[%s356 + $0x4] sm:$0xf]
    %v359 = vld [vmem:[%s356 + $0x8] sm:$0xf]
    %v360 = vld [vmem:[%s356 + $0xc] sm:$0xf]
    %v361 = vld [vmem:[%s356 + $0x10] sm:$0xf]
    %v362 = vld [vmem:[%s356 + $0x14] sm:$0xf]
    %v363 = vld [vmem:[%s356 + $0x18] sm:$0xf]
    %v364 = vld [vmem:[%s356 + $0x1c] sm:$0xf]
    %v365 = vld [vmem:[%s356 + $0x20] sm:$0xf]
    %v366 = vld [vmem:[%s356 + $0x24] sm:$0xf]
    %v367 = vld [vmem:[%s356 + $0x28] sm:$0xf]
    %v368 = vld [vmem:[%s356 + $0x2c] sm:$0xf]
    %v369 = vld [vmem:[%s356 + $0x30] sm:$0xf]
    %v370 = vld [vmem:[%s356 + $0x34] sm:$0xf]
    %v371 = vld [vmem:[%s356 + $0x38] sm:$0xf]
    %v372 = vld [vmem:[%s356 + $0x3c] sm:$0xf]
    %s373 = scalar_lea.vmem [#allocation7], 3
    %v374 = vld [vmem:[%s373] sm:$0x1]
    %v376 = vlaneseq
    %v377 = vshrl.u32 %v376, 7
    %v378 = vsub.s32 0, %v377
    %v379 = vrot.slane %v374, %v378
    %v397 = vunpack.c.l.b16 %v357
    %v398 = vunpack.c.l.b16 %v358
    %v399 = vunpack.c.l.b16 %v359
    %v400 = vunpack.c.l.b16 %v360
    %v401 = vunpack.c.l.b16 %v361
    %v402 = vunpack.c.l.b16 %v362
    %v403 = vunpack.c.l.b16 %v363
    %v404 = vunpack.c.l.b16 %v364
    %v405 = vunpack.c.l.b16 %v365
    %v406 = vunpack.c.l.b16 %v366
    %v407 = vunpack.c.l.b16 %v367
    %v408 = vunpack.c.l.b16 %v368
    %v409 = vunpack.c.l.b16 %v369
    %v410 = vunpack.c.l.b16 %v370
    %v411 = vunpack.c.l.b16 %v371
    %v412 = vunpack.c.l.b16 %v372
    %v413 = vpack.c.b16 %v398, %v397
    %v414 = vpack.c.b16 %v400, %v399
    %v415 = vpack.c.b16 %v402, %v401
    %v416 = vpack.c.b16 %v404, %v403
    %v417 = vpack.c.b16 %v406, %v405
    %v418 = vpack.c.b16 %v408, %v407
    %v419 = vpack.c.b16 %v410, %v409
    %v420 = vpack.c.b16 %v412, %v411
    %429 = vmatprep.subr.bf16.mxu0 0
    %430 = vmatpush1.bf16.msra.mxu0 %v420
    %431 = vmatprep.subr.bf16.mxu0 0
    %432 = vmatpush1.bf16.msra.mxu0 %v419
    %433 = vmatprep.subr.bf16.mxu0 0
    %434 = vmatpush1.bf16.msra.mxu0 %v418
    %435 = vmatprep.subr.bf16.mxu0 0
    %436 = vmatpush1.bf16.msra.mxu0 %v417
    %437 = vmatprep.subr.bf16.mxu0 0
    %438 = vmatpush1.bf16.msra.mxu0 %v416
    %439 = vmatprep.subr.bf16.mxu0 0
    %440 = vmatpush1.bf16.msra.mxu0 %v415
    %441 = vmatprep.subr.bf16.mxu0 0
    %442 = vmatpush1.bf16.msra.mxu0 %v414
    %443 = vmatprep.subr.bf16.mxu0 0
    %444 = vmatpush1.bf16.msra.mxu0 %v413
    %445 = vmatprep.subr.bf16.mxu0 0
    %446 = vmatpush2.bf16.msra.mxu0 0
    %447 = vmatprep.subr.bf16.mxu0 0
    %448 = vmatpush2.bf16.msra.mxu0 0
    %449 = vmatprep.subr.bf16.mxu0 0
    %450 = vmatpush2.bf16.msra.mxu0 0
    %451 = vmatprep.subr.bf16.mxu0 0
    %452 = vmatpush2.bf16.msra.mxu0 0
    %453 = vmatprep.subr.bf16.mxu0 0
    %454 = vmatpush2.bf16.msra.mxu0 0
    %455 = vmatprep.subr.bf16.mxu0 0
    %456 = vmatpush2.bf16.msra.mxu0 0
    %457 = vmatprep.subr.bf16.mxu0 0
    %458 = vmatpush2.bf16.msra.mxu0 0
    %459 = vmatprep.subr.bf16.mxu0 0
    %460 = vmatpush2.bf16.msra.mxu0 0
    %461 = vmatprep.mubr.bf16.mxu0 0
    %462 = vmatmul.mubr.bf16.gmra.mxu0 %v355
    %v463 = vpop.f32.mrf.mxu0
    %v464 = vadd.f32 %v379, %v463
    %v465 = vpop.f32.mrf.mxu0
    %v466 = vpop.f32.mrf.mxu0
    %v467 = vpop.f32.mrf.mxu0
    %468 = vdwg.mxu0
    %v469 = vmax.f32 %v464, 0.0
    %v470 = vpack.c.bf16 %v469, %v469
    %s471 = scalar_lea.vmem [#allocation5], 256
    %v472 = vld [vmem:[%s471] sm:$0xf]
    %v473 = vld [vmem:[%s471 + $0x4] sm:$0xf]
    %v474 = vld [vmem:[%s471 + $0x8] sm:$0xf]
    %v475 = vld [vmem:[%s471 + $0xc] sm:$0xf]
    %v476 = vld [vmem:[%s471 + $0x10] sm:$0xf]
    %v477 = vld [vmem:[%s471 + $0x14] sm:$0xf]
    %v478 = vld [vmem:[%s471 + $0x18] sm:$0xf]
    %v479 = vld [vmem:[%s471 + $0x1c] sm:$0xf]
    %v480 = vld [vmem:[%s471 + $0x20] sm:$0xf]
    %v481 = vld [vmem:[%s471 + $0x24] sm:$0xf]
    %v482 = vld [vmem:[%s471 + $0x28] sm:$0xf]
    %v483 = vld [vmem:[%s471 + $0x2c] sm:$0xf]
    %v484 = vld [vmem:[%s471 + $0x30] sm:$0xf]
    %v485 = vld [vmem:[%s471 + $0x34] sm:$0xf]
    %v486 = vld [vmem:[%s471 + $0x38] sm:$0xf]
    %v487 = vld [vmem:[%s471 + $0x3c] sm:$0xf]
    %s488 = scalar_lea.vmem [#allocation7], 4
    %v489 = vld [vmem:[%s488] sm:$0x1]
    %v491 = vlaneseq
    %v492 = vshrl.u32 %v491, 7
    %v493 = vsub.s32 0, %v492
    %v494 = vrot.slane %v489, %v493
    %v512 = vunpack.c.l.b16 %v472
    %v513 = vunpack.c.l.b16 %v473
    %v514 = vunpack.c.l.b16 %v474
    %v515 = vunpack.c.l.b16 %v475
    %v516 = vunpack.c.l.b16 %v476
    %v517 = vunpack.c.l.b16 %v477
    %v518 = vunpack.c.l.b16 %v478
    %v519 = vunpack.c.l.b16 %v479
    %v520 = vunpack.c.l.b16 %v480
    %v521 = vunpack.c.l.b16 %v481
    %v522 = vunpack.c.l.b16 %v482
    %v523 = vunpack.c.l.b16 %v483
    %v524 = vunpack.c.l.b16 %v484
    %v525 = vunpack.c.l.b16 %v485
    %v526 = vunpack.c.l.b16 %v486
    %v527 = vunpack.c.l.b16 %v487
    %v528 = vpack.c.b16 %v513, %v512
    %v529 = vpack.c.b16 %v515, %v514
    %v530 = vpack.c.b16 %v517, %v516
    %v531 = vpack.c.b16 %v519, %v518
    %v532 = vpack.c.b16 %v521, %v520
    %v533 = vpack.c.b16 %v523, %v522
    %v534 = vpack.c.b16 %v525, %v524
    %v535 = vpack.c.b16 %v527, %v526
    %544 = vmatprep.subr.bf16.mxu0 0
    %545 = vmatpush1.bf16.msra.mxu0 %v535
    %546 = vmatprep.subr.bf16.mxu0 0
    %547 = vmatpush1.bf16.msra.mxu0 %v534
    %548 = vmatprep.subr.bf16.mxu0 0
    %549 = vmatpush1.bf16.msra.mxu0 %v533
    %550 = vmatprep.subr.bf16.mxu0 0
    %551 = vmatpush1.bf16.msra.mxu0 %v532
    %552 = vmatprep.subr.bf16.mxu0 0
    %553 = vmatpush1.bf16.msra.mxu0 %v531
    %554 = vmatprep.subr.bf16.mxu0 0
    %555 = vmatpush1.bf16.msra.mxu0 %v530
    %556 = vmatprep.subr.bf16.mxu0 0
    %557 = vmatpush1.bf16.msra.mxu0 %v529
    %558 = vmatprep.subr.bf16.mxu0 0
    %559 = vmatpush1.bf16.msra.mxu0 %v528
    %560 = vmatprep.subr.bf16.mxu0 0
    %561 = vmatpush2.bf16.msra.mxu0 0
    %562 = vmatprep.subr.bf16.mxu0 0
    %563 = vmatpush2.bf16.msra.mxu0 0
    %564 = vmatprep.subr.bf16.mxu0 0
    %565 = vmatpush2.bf16.msra.mxu0 0
    %566 = vmatprep.subr.bf16.mxu0 0
    %567 = vmatpush2.bf16.msra.mxu0 0
    %568 = vmatprep.subr.bf16.mxu0 0
    %569 = vmatpush2.bf16.msra.mxu0 0
    %570 = vmatprep.subr.bf16.mxu0 0
    %571 = vmatpush2.bf16.msra.mxu0 0
    %572 = vmatprep.subr.bf16.mxu0 0
    %573 = vmatpush2.bf16.msra.mxu0 0
    %574 = vmatprep.subr.bf16.mxu0 0
    %575 = vmatpush2.bf16.msra.mxu0 0
    %576 = vmatprep.mubr.bf16.mxu0 0
    %577 = vmatmul.mubr.bf16.gmra.mxu0 %v470
    %v578 = vpop.f32.mrf.mxu0
    %v579 = vadd.f32 %v494, %v578
    %v580 = vpop.f32.mrf.mxu0
    %v581 = vpop.f32.mrf.mxu0
    %v582 = vpop.f32.mrf.mxu0
    %583 = vdwg.mxu0
    %584 = vst [vmem:[#allocation8] sm:$0xff] %v579
    // Predicated region
    $region26: #{multi_controller_forward.1} parent=1 // pred_check
      _
    $region27: #{multi_controller_forward.1} parent=1 // pred_check_branch
      %586 = sbr.rel (0) target = $region29
    $region28: #{multi_controller_forward.1} parent=1 // pred_region
      %s588 = ssub.s32 128, 128
      %589 = vsyncadd [#allocation4], %s588
      %s591 = sshll.u32 [#allocation8], 4
      %s592 = int_to_ptr.vmem [resolvable:$true] %s591
      %594 = dma.vmem_to_hbm [thread:$0]  %s592, 128, %s3, [#allocation4]
    $region29: #{multi_controller_forward.1} parent=1 // pred_fallthru
      _
    // Predicated region
    $region30: #{multi_controller_forward.1} parent=1 // pred_check
      _
    $region31: #{multi_controller_forward.1} parent=1 // pred_check_branch
      %596 = sbr.rel (0) target = $region33
    $region32: #{multi_controller_forward.1} parent=1 // pred_region
      %597 = dma.done [#allocation4], 128
    $region33: #{multi_controller_forward.1} parent=1 // pred_fallthru
      _
    %598 = vsyncpa [#allocation3], 1
    %599 = vsyncpa [#allocation6], 1
    %600 = vsyncpa [#allocation4], 1

</llo_original>
